<compile_context>
chip_gen: v7x
topology: tpu7x:2x2x1
jax: 0.10.0
libtpu: 0.0.40
codegen_flags: <defaults>
</compile_context>

<pallas_src>
import functools

import jax
import jax.numpy as jnp
from jax.experimental import pallas as pl
from jax.experimental.pallas import tpu as pltpu

_EPS = 1e-6  # torch pairwise_distance default eps


def _contrastive_kernel(o1_ref, o2_ref, lab_ref, out_ref, acc_ref, *,
                        margin, batch, bm, tiles_per_core, need_mask):
    c = pl.program_id(0)          # core axis (CORE_PARALLEL on 2-TC chips)
    t = pl.program_id(1)          # batch-tile (reduction) axis

    @pl.when(t == 0)
    def _init():
        acc_ref[...] = jnp.zeros_like(acc_ref)

    # Cast AFTER the load so HBM traffic stays in the native (e.g. bf16) dtype.
    o1 = o1_ref[...].astype(jnp.float32)
    o2 = o2_ref[...].astype(jnp.float32)
    lab = lab_ref[...].astype(jnp.float32)

    diff = o1 - o2 + _EPS                                     # (bm, D)
    d2 = jnp.sum(diff * diff, axis=-1, keepdims=True)         # (bm, 1)
    d = jnp.sqrt(d2)

    pos = (1.0 - lab) * d2                                    # d**2 == d2 exactly
    neg = lab * jnp.square(jnp.maximum(margin - d, 0.0))
    val = pos + neg                                           # (bm, 1)

    if need_mask:                                             # static python branch
        tile_idx = c * tiles_per_core + t
        row_ids = tile_idx * bm + jax.lax.broadcasted_iota(jnp.int32, (bm, 1), 0)
        val = jnp.where(row_ids < batch, val, 0.0)            # select, not multiply

    acc_ref[...] += jnp.sum(val, keepdims=True)               # (1,1) scalar acc

    @pl.when(t == tiles_per_core - 1)
    def _finalize():
        total = jnp.sum(acc_ref[...])
        out_ref[...] = jnp.broadcast_to(total, out_ref.shape).astype(out_ref.dtype)


def _round_up(x, m):
    return ((x + m - 1) // m) * m


def _sublane_multiple(dtype):
    # f32/i32 -> 8, bf16/f16 -> 16, int8/fp8 -> 32 (packed sublane tiles).
    return max(8, 32 // jnp.dtype(dtype).itemsize)


def _num_tensorcores_per_chip():
    # Only v7x has 2 TensorCores per chip; v5e/v6e are single-TC.
    try:
        kind = jax.devices()[0].device_kind.lower().replace(" ", "")
        if "v7" in kind or "7x" in kind:
            return 2
    except Exception:  # pragma: no cover
        pass
    return 1


def contrastive_loss(output1, output2, label, margin):
    """Pallas TPU implementation of ContrastiveLoss.forward."""
    assert output1.shape == output2.shape and output1.ndim == 2
    B, D = output1.shape

    label = jnp.asarray(label)
    if label.dtype == jnp.bool_:
        label = label.astype(jnp.float32)       # avoid 1-bit packed layouts
    lab2d = label.reshape(B, 1)                 # streamed in its native dtype

    feat_item = jnp.dtype(output1.dtype).itemsize
    lab_item = jnp.dtype(lab2d.dtype).itemsize

    # ---- generation-aware VMEM budget (v7x has only 64 MiB per TC) --------
    try:
        vmem_bytes = int(pltpu.get_tpu_info().vmem_capacity_bytes)
    except Exception:  # pragma: no cover - conservative fallback
        vmem_bytes = 64 * 1024 * 1024
    vmem_limit = (vmem_bytes * 3) // 4                 # 48 MiB v7x / 96 MiB v5e-v6e
    budget = max(vmem_limit - (8 << 20), 4 << 20)      # headroom under the limit

    D_pad = _round_up(D, 128)
    sub = max(_sublane_multiple(output1.dtype), _sublane_multiple(lab2d.dtype))

    # VMEM bytes tied to one batch row of a tile:
    #   2 feature inputs x 2 pipeline buffers   (native dtype, lane padded)
    #   label x 2 pipeline buffers               ((bm,1) lane-pads to 128)
    #   f32 upcast / diff / square temporaries   (worst case ~4 live)
    #   (bm,1) f32 per-row temporaries           (lane padded)
    per_row = (4 * D_pad * feat_item
               + 2 * 128 * lab_item
               + 4 * D_pad * 4
               + 4 * 128 * 4)

    # Multi-MiB tiles to reach >=85-95% of the HBM roofline; byte cap, not rows.
    target_tile_bytes = (8 << 20) if vmem_bytes >= (96 << 20) else (4 << 20)

    b_pad = _round_up(B, sub)
    bm = min(budget // per_row, target_tile_bytes // (D_pad * feat_item), b_pad)
    bm = max(sub, (bm // sub) * sub)            # dtype-aware sublane multiple

    n_tiles = -(-B // bm)
    last_blk = n_tiles - 1
    num_cores = _num_tensorcores_per_chip()

    def run(nc):
        tpc = -(-n_tiles // nc)                        # ceil split across cores
        need_mask = (nc * tpc * bm) != B

        kernel = functools.partial(
            _contrastive_kernel, margin=float(margin), batch=B, bm=bm,
            tiles_per_core=tpc, need_mask=need_mask)

        def in_row(c, t):
            # Clamp the block index: a core's trailing (fully out-of-range)
            # tiles re-read the last valid block and are zeroed by the mask.
            return (jnp.minimum(c * tpc + t, last_blk), 0)

        dim_sem = (pltpu.CORE_PARALLEL if nc > 1 else pltpu.ARBITRARY,
                   pltpu.ARBITRARY)

        cost = pl.CostEstimate(
            flops=5 * B * D + 10 * B,
            transcendentals=B,                                 # one sqrt per row
            bytes_accessed=2 * B * D * feat_item + B * lab_item + nc * 8 * 128 * 4)

        out = pl.pallas_call(
            kernel,
            out_shape=jax.ShapeDtypeStruct((nc, 8, 128), jnp.float32),
            grid_spec=pltpu.PrefetchScalarGridSpec(
                num_scalar_prefetch=0,
                grid=(nc, tpc),
                in_specs=[
                    pl.BlockSpec((bm, D), in_row),
                    pl.BlockSpec((bm, D), in_row),
                    pl.BlockSpec((bm, 1), in_row),
                ],
                out_specs=pl.BlockSpec((1, 8, 128), lambda c, t: (c, 0, 0)),
                scratch_shapes=[pltpu.VMEM((1, 1), jnp.float32)],
            ),
            compiler_params=pltpu.CompilerParams(
                dimension_semantics=dim_sem,
                vmem_limit_bytes=int(vmem_limit)),
            cost_estimate=cost,
        )(output1, output2, lab2d)
        return jax.block_until_ready(out)

    nc = 2 if (num_cores >= 2 and n_tiles >= 2) else 1
    if nc > 1:
        try:
            out = run(nc)
        except Exception:  # pragma: no cover - conservative single-core fallback
            out = run(1)
    else:
        out = run(1)

    # One partial sum per core, broadcast over its (8,128) slab; divide by the
    # TRUE batch size.
    return jnp.sum(out[:, 0, 0]) / B


def _reference(output1, output2, label, margin):
    diff = output1 - output2 + _EPS
    d = jnp.sqrt(jnp.sum(diff * diff, axis=-1))
    pos = (1.0 - label) * d**2
    neg = label * jnp.maximum(margin - d, 0.0) ** 2
    return jnp.mean(pos + neg)


if __name__ == "__main__":
    margin = 2.0

    # Case 1: small aligned shapes, f32 features.
    k1, k2, k3 = jax.random.split(jax.random.PRNGKey(0), 3)
    o1 = jax.random.normal(k1, (8, 32), dtype=jnp.float32)
    o2 = jax.random.normal(k2, (8, 32), dtype=jnp.float32)
    lab = jax.random.bernoulli(k3, 0.5, (8,)).astype(jnp.float32)
    loss = contrastive_loss(o1, o2, lab, margin)
    jax.block_until_ready(loss)
    ref = _reference(o1, o2, lab, margin)
    assert jnp.allclose(loss, ref, rtol=1e-5, atol=1e-5), (loss, ref)

    # Case 2: ragged batch (exercises padded-row masking) + native bf16 inputs.
    k4, k5, k6 = jax.random.split(jax.random.PRNGKey(1), 3)
    o1b = jax.random.normal(k4, (20, 128), dtype=jnp.float32).astype(jnp.bfloat16)
    o2b = jax.random.normal(k5, (20, 128), dtype=jnp.float32).astype(jnp.bfloat16)
    labb = jax.random.bernoulli(k6, 0.5, (20,)).astype(jnp.float32)
    loss_b = contrastive_loss(o1b, o2b, labb, margin)
    jax.block_until_ready(loss_b)
    ref_b = _reference(o1b.astype(jnp.float32), o2b.astype(jnp.float32), labb, margin)
    assert jnp.allclose(loss_b, ref_b, rtol=1e-4, atol=1e-4), (loss_b, ref_b)

    print("KERNEL_OK")
</pallas_src>

<mosaic_0001>
module attributes {stable_mosaic.version = 11 : i64} {
  func.func @_contrastive_kernel(%arg0: i32, %arg1: i32, %arg2: memref<8x32xf32, #tpu.memory_space<vmem>>, %arg3: memref<8x32xf32, #tpu.memory_space<vmem>>, %arg4: memref<8x1xf32, #tpu.memory_space<vmem>>, %arg5: memref<1x8x128xf32, #tpu.memory_space<vmem>>, %arg6: memref<1x1xf32, #tpu.memory_space<vmem>>) attributes {dimension_semantics = [#tpu.dimension_semantics<arbitrary>, #tpu.dimension_semantics<arbitrary>], iteration_bounds = array<i64: 1, 1>, scalar_prefetch = 0 : i64, scratch_operands = 1 : i64, tpu.core_type = #tpu.core_type<tc>, window_params = [{transform_indices = @transform_0, window_bounds = array<i64: 8, 32>}, {transform_indices = @transform_1, window_bounds = array<i64: 8, 32>}, {transform_indices = @transform_2, window_bounds = array<i64: 8, 1>}, {transform_indices = @transform_3, window_bounds = array<i64: 1, 8, 128>}]} {
    %c0_i32 = arith.constant 0 : i32
    %0 = arith.cmpi eq, %arg1, %c0_i32 : i32
    %1 = arith.extui %0 : i1 to i32
    %c0_i32_0 = arith.constant 0 : i32
    %2 = arith.cmpi ne, %1, %c0_i32_0 : i32
    scf.if %2 {
      %cst_17 = arith.constant 0.000000e+00 : f32
      %34 = vector.broadcast %cst_17 : f32 to vector<1x1xf32>
      %c0_18 = arith.constant 0 : index
      %c0_19 = arith.constant 0 : index
      %35 = vector.load %arg6[%c0_18, %c0_19] : memref<1x1xf32, #tpu.memory_space<vmem>>, vector<1x1xf32>
      tpu.vector_store %arg6[%c0_18, %c0_19], %34 {strides = array<i32>} : memref<1x1xf32, #tpu.memory_space<vmem>>, vector<1x1xf32>,
    } else {
    }
    %c0 = arith.constant 0 : index
    %c0_1 = arith.constant 0 : index
    %3 = vector.load %arg2[%c0, %c0_1] : memref<8x32xf32, #tpu.memory_space<vmem>>, vector<8x32xf32>
    %c0_2 = arith.constant 0 : index
    %c0_3 = arith.constant 0 : index
    %4 = vector.load %arg3[%c0_2, %c0_3] : memref<8x32xf32, #tpu.memory_space<vmem>>, vector<8x32xf32>
    %c0_4 = arith.constant 0 : index
    %c0_5 = arith.constant 0 : index
    %5 = vector.load %arg4[%c0_4, %c0_5] : memref<8x1xf32, #tpu.memory_space<vmem>>, vector<8x1xf32>
    %6 = arith.subf %3, %4 : vector<8x32xf32>
    %cst = arith.constant 9.99999997E-7 : f32
    %7 = vector.broadcast %cst : f32 to vector<8x32xf32>
    %8 = arith.addf %6, %7 : vector<8x32xf32>
    %9 = arith.mulf %8, %8 : vector<8x32xf32>
    %cst_6 = arith.constant dense<0.000000e+00> : vector<8xf32>
    %10 = vector.multi_reduction <add>, %9, %cst_6 [1] : vector<8x32xf32> to vector<8xf32>
    %11 = vector.shape_cast %10 : vector<8xf32> to vector<8x1xf32>
    %12 = math.sqrt %11 : vector<8x1xf32>
    %cst_7 = arith.constant 1.000000e+00 : f32
    %13 = vector.broadcast %cst_7 : f32 to vector<8x1xf32>
    %14 = arith.subf %13, %5 : vector<8x1xf32>
    %15 = arith.mulf %14, %11 : vector<8x1xf32>
    %cst_8 = arith.constant 2.000000e+00 : f32
    %16 = vector.broadcast %cst_8 : f32 to vector<8x1xf32>
    %17 = arith.subf %16, %12 : vector<8x1xf32>
    %cst_9 = arith.constant 0.000000e+00 : f32
    %18 = vector.broadcast %cst_9 : f32 to vector<8x1xf32>
    %19 = arith.maximumf %17, %18 : vector<8x1xf32>
    %20 = arith.mulf %19, %19 : vector<8x1xf32>
    %21 = arith.mulf %5, %20 : vector<8x1xf32>
    %22 = arith.addf %15, %21 : vector<8x1xf32>
    %c0_10 = arith.constant 0 : index
    %c0_11 = arith.constant 0 : index
    %23 = vector.load %arg6[%c0_10, %c0_11] : memref<1x1xf32, #tpu.memory_space<vmem>>, vector<1x1xf32>
    %24 = vector.shape_cast %22 : vector<8x1xf32> to vector<1x8x1xf32>
    %cst_12 = arith.constant dense<0.000000e+00> : vector<1xf32>
    %25 = vector.multi_reduction <add>, %24, %cst_12 [1, 2] : vector<1x8x1xf32> to vector<1xf32>
    %26 = vector.shape_cast %25 : vector<1xf32> to vector<1x1x1xf32>
    %27 = vector.extract %26[0, 0, 0] : f32 from vector<1x1x1xf32>
    %28 = vector.broadcast %27 : f32 to vector<1x1xf32>
    %29 = arith.addf %23, %28 : vector<1x1xf32>
    %c0_13 = arith.constant 0 : index
    %c0_14 = arith.constant 0 : index
    %30 = vector.load %arg6[%c0_13, %c0_14] : memref<1x1xf32, #tpu.memory_space<vmem>>, vector<1x1xf32>
    tpu.vector_store %arg6[%c0_13, %c0_14], %29 {strides = array<i32>} : memref<1x1xf32, #tpu.memory_space<vmem>>, vector<1x1xf32>,
    %c0_i32_15 = arith.constant 0 : i32
    %31 = arith.cmpi eq, %arg1, %c0_i32_15 : i32
    %32 = arith.extui %31 : i1 to i32
    %c0_i32_16 = arith.constant 0 : i32
    %33 = arith.cmpi ne, %32, %c0_i32_16 : i32
    scf.if %33 {
      %c0_17 = arith.constant 0 : index
      %c0_18 = arith.constant 0 : index
      %34 = vector.load %arg6[%c0_17, %c0_18] : memref<1x1xf32, #tpu.memory_space<vmem>>, vector<1x1xf32>
      %35 = vector.shape_cast %34 : vector<1x1xf32> to vector<1x1x1xf32>
      %cst_19 = arith.constant dense<0.000000e+00> : vector<1xf32>
      %36 = vector.multi_reduction <add>, %35, %cst_19 [1, 2] : vector<1x1x1xf32> to vector<1xf32>
      %37 = vector.shape_cast %36 : vector<1xf32> to vector<1x1x1xf32>
      %38 = vector.extract %37[0, 0, 0] : f32 from vector<1x1x1xf32>
      %39 = vector.broadcast %38 : f32 to vector<1x8x128xf32>
      %c0_20 = arith.constant 0 : index
      %c0_21 = arith.constant 0 : index
      %c0_22 = arith.constant 0 : index
      %40 = vector.load %arg5[%c0_20, %c0_21, %c0_22] : memref<1x8x128xf32, #tpu.memory_space<vmem>>, vector<1x8x128xf32>
      tpu.vector_store %arg5[%c0_20, %c0_21, %c0_22], %39 {strides = array<i32>} : memref<1x8x128xf32, #tpu.memory_space<vmem>>, vector<1x8x128xf32>,
    } else {
    }
    return
  }
  func.func @transform_0(%arg0: i32, %arg1: i32) -> (i32, i32) {
    %c1_i32 = arith.constant 1 : i32
    %0 = arith.muli %arg0, %c1_i32 : i32
    %1 = arith.addi %0, %arg1 : i32
    %c0_i32 = arith.constant 0 : i32
    %2 = arith.minsi %1, %c0_i32 : i32
    %c0_i32_0 = arith.constant 0 : i32
    %c0_i32_1 = arith.constant 0 : i32
    return %2, %c0_i32_0 : i32, i32
  }
  func.func @transform_1(%arg0: i32, %arg1: i32) -> (i32, i32) {
    %c1_i32 = arith.constant 1 : i32
    %0 = arith.muli %arg0, %c1_i32 : i32
    %1 = arith.addi %0, %arg1 : i32
    %c0_i32 = arith.constant 0 : i32
    %2 = arith.minsi %1, %c0_i32 : i32
    %c0_i32_0 = arith.constant 0 : i32
    %c0_i32_1 = arith.constant 0 : i32
    return %2, %c0_i32_0 : i32, i32
  }
  func.func @transform_2(%arg0: i32, %arg1: i32) -> (i32, i32) {
    %c1_i32 = arith.constant 1 : i32
    %0 = arith.muli %arg0, %c1_i32 : i32
    %1 = arith.addi %0, %arg1 : i32
    %c0_i32 = arith.constant 0 : i32
    %2 = arith.minsi %1, %c0_i32 : i32
    %c0_i32_0 = arith.constant 0 : i32
    %c0_i32_1 = arith.constant 0 : i32
    return %2, %c0_i32_0 : i32, i32
  }
  func.func @transform_3(%arg0: i32, %arg1: i32) -> (i32, i32, i32) {
    %c0_i32 = arith.constant 0 : i32
    %c0_i32_0 = arith.constant 0 : i32
    %c0_i32_1 = arith.constant 0 : i32
    return %arg0, %c0_i32, %c0_i32_0 : i32, i32, i32
  }
}

</mosaic_0001>

<llo_original>
// kernel: tpu_custom_call.1
$region0: #{tpu_custom_call.1}
  #allocation0 [shape = 'u32[]', space=smem, size = 0x4, offset = 0x4, fixed_abs, tag = 'smem constant byte address 0x4 - core index']
  #allocation1 [shape = 'u32[144,128]{1,0:T(1,128)}', space=vmem, size = 0x12000, scoped, tag = 'internal scratch']
  #allocation2 [shape = 'f32[1,1]{1,0:T(1,128)}', space=vmem, size = 0x200, scoped, tag = 'scratch operand']
  %s0 = inlined_call_operand.vmem [shape: f32[8,32], index: 0, kind: input, shape index: {}]
  %s1 = inlined_call_operand.hbm [shape: f32[8,32], index: 1, kind: input, shape index: {}]
  %s2 = inlined_call_operand.vmem [shape: f32[8,1], index: 2, kind: input, shape index: {}]
  %s3 = inlined_call_operand.hbm [shape: f32[1,8,128], index: 3, kind: output, shape index: {}]
  %s4 = sld [smem:[#allocation0]]
  $region34: #{tpu_custom_call.1} parent=0
    _
  %s6 = ssub.s32 1, %s4
  %s7 = scalar_select 0, %s6, %s4
  $region1: #{tpu_custom_call.1} parent=0
    #allocation3 [shape = 'u8[4096]{0}', space=vmem, size = 0x1000, scoped, tag = 'input window, operand 1, single buffered']
    #allocation4 [shape = 's32[1]{0}', space=sflag, size = 0x4, scoped, tag = 'scoped memory for tpu_custom_call.1']
    #allocation5 [shape = 's32[1]{0}', space=sflag, size = 0x4, scoped, tag = 'scoped memory for tpu_custom_call.1']
    #allocation6 [shape = 'u8[4096]{0}', space=vmem, size = 0x1000, scoped, tag = 'output window, operand 0, single buffered']
    %8 = vsyncpa [#allocation4], 0
    %9 = vsyncpa [#allocation5], 0
    // Predicated region
    $region2: #{tpu_custom_call.1} parent=1 // pred_check
      _
    $region3: #{tpu_custom_call.1} parent=1 // pred_check_branch
      %11 = sbr.rel (0) target = $region5
    $region4: #{tpu_custom_call.1} parent=1 // pred_region
      %s12 = sadd.s32 0, 0
      %p13 = scmp.lt.s32.totalorder %s12, 0
      %s14 = scalar_select %p13, %s12, 0
      %p15 = scmp.lt.s32.totalorder %s14, 0
      %s16 = scalar_select %p15, %s14, 0
      %s17 = smul.addr %s16, 8
      %s18 = scalar_lea.vmem %s0, %s17
      %s19 = sadd.s32 0, 0
      %p20 = scmp.lt.s32.totalorder %s19, 0
      %s21 = scalar_select %p20, %s19, 0
    $region5: #{tpu_custom_call.1} parent=1 // pred_fallthru
      _
    // Predicated region
    $region6: #{tpu_custom_call.1} parent=1 // pred_check
      _
    $region7: #{tpu_custom_call.1} parent=1 // pred_check_branch
      %23 = sbr.rel (0) target = $region9
    $region8: #{tpu_custom_call.1} parent=1 // pred_region
      %s24 = sadd.s32 0, 0
      %p25 = scmp.lt.s32.totalorder %s24, 0
      %s26 = scalar_select %p25, %s24, 0
      %s28 = ssub.s32 128, 128
      %29 = vsyncadd [#allocation4], %s28
      %s30 = smul.addr %s26, 128
      %s31 = scalar_lea.hbm %s1, %s30
      %s33 = sshll.u32 [#allocation3], 4
      %s34 = int_to_ptr.vmem [resolvable:$true] %s33
      %36 = dma.hbm_to_vmem [thread:$0]  %s31, 128, %s34, [#allocation4]
    $region9: #{tpu_custom_call.1} parent=1 // pred_fallthru
      _
    // Predicated region
    $region10: #{tpu_custom_call.1} parent=1 // pred_check
      _
    $region11: #{tpu_custom_call.1} parent=1 // pred_check_branch
      %38 = sbr.rel (0) target = $region13
    $region12: #{tpu_custom_call.1} parent=1 // pred_region
      %s39 = sadd.s32 0, 0
      %p40 = scmp.lt.s32.totalorder %s39, 0
      %s41 = scalar_select %p40, %s39, 0
      %p42 = scmp.lt.s32.totalorder %s41, 0
      %s43 = scalar_select %p42, %s41, 0
      %s44 = smul.addr %s43, 8
      %s45 = scalar_lea.vmem %s2, %s44
      %s46 = sadd.s32 0, 0
      %p47 = scmp.lt.s32.totalorder %s46, 0
      %s48 = scalar_select %p47, %s46, 0
    $region13: #{tpu_custom_call.1} parent=1 // pred_fallthru
      _
    // Predicated region
    $region14: #{tpu_custom_call.1} parent=1 // pred_check
      _
    $region15: #{tpu_custom_call.1} parent=1 // pred_check_branch
      %50 = sbr.rel (0) target = $region17
    $region16: #{tpu_custom_call.1} parent=1 // pred_region
      %51 = dma.done [#allocation4], 128
    $region17: #{tpu_custom_call.1} parent=1 // pred_fallthru
      _
    %s52 = sadd.s32 0, 0
    %p53 = scmp.lt.s32.totalorder %s52, 0
    %s54 = scalar_select %p53, %s52, 0
    %p55 = scmp.lt.s32.totalorder %s54, 0
    %s56 = scalar_select %p55, %s54, 0
    %s57 = smul.addr %s56, 8
    %s58 = scalar_lea.vmem %s0, %s57
    %s59 = sadd.s32 0, 0
    %p60 = scmp.lt.s32.totalorder %s59, 0
    %s61 = scalar_select %p60, %s59, 0
    %p62 = scmp.lt.s32.totalorder %s61, 0
    %s63 = scalar_select %p62, %s61, 0
    %s64 = smul.addr %s63, 8
    %s65 = scalar_lea.vmem %s2, %s64
    %s66 = sadd.s32 0, 0
    %p67 = scmp.lt.s32.totalorder %s66, 0
    %s68 = scalar_select %p67, %s66, 0
    %p69 = scmp.lt.s32.totalorder %s68, 0
    %s70 = scalar_select %p69, %s68, 0
    %s71 = smul.addr %s70, 8
    %s72 = scalar_lea.vmem %s0, %s71
    %s73 = sadd.s32 0, 0
    %p74 = scmp.lt.s32.totalorder %s73, 0
    %s75 = scalar_select %p74, %s73, 0
    %s76 = sadd.s32 0, 0
    %p77 = scmp.lt.s32.totalorder %s76, 0
    %s78 = scalar_select %p77, %s76, 0
    %s79 = sadd.s32 0, 0
    %p80 = scmp.lt.s32.totalorder %s79, 0
    %s81 = scalar_select %p80, %s79, 0
    %p82 = scmp.lt.s32.totalorder %s81, 0
    %s83 = scalar_select %p82, %s81, 0
    %s84 = smul.addr %s83, 8
    %s85 = scalar_lea.vmem %s2, %s84
    %s86 = sadd.s32 0, 0
    %p87 = scmp.lt.s32.totalorder %s86, 0
    %s88 = scalar_select %p87, %s86, 0
    %p89 = scmp.eq.s32.totalorder 0, 0
    // Predicated region
    $region18: #{tpu_custom_call.1} parent=1 // pred_check
      %p90 = pneg %p89
    $region19: #{tpu_custom_call.1} parent=1 // pred_check_branch
      %92 = sbr.rel (%p90) target = $region21
    $region20: #{tpu_custom_call.1} parent=1 // pred_region
      %vm93 = vcmask 0
      %94 = vst.msk [vmem:[#allocation2] sm:$0x1] %vm93, 0.0
    $region21: #{tpu_custom_call.1} parent=1 // pred_fallthru
      _
    %v95 = vld [vmem:[%s72] sm:$0xff]
    %v96 = vld [vmem:[#allocation3] sm:$0xff]
    %v97 = vld [vmem:[%s85] sm:$0xff]
    %v98 = vsub.f32 %v95, %v96
    %v99 = vadd.f32 %v98, 1e-06
    %v100 = vmul.f32 %v99, %v99
    %vm101 = vcmask 261120
    %v102 = vsel %vm101, %v100, 0.0
    %103 = vadd.xlane.f32.xlu0 %v102
    %v104 = vpop.xlane.xlu0 %103
    %v105 = vrsqrt.pop %v104
    %v106 = vmul.f32 %v104, %v105
    %vm107 = vcmp.eq.f32.partialorder %v104, inf
    %v108 = vsel %vm107, %v104, %v106
    %vm109 = vcmp.eq.f32.partialorder %v104, 0.0
    %v110 = vand.u32 %v104, 2147483648
    %v111 = vsel %vm109, %v110, %v108
    %v112 = vsub.f32 1.0, %v97
    %v113 = vmul.f32 %v112, %v104
    %v114 = vsub.f32 2.0, %v111
    %v115 = vmax.f32 %v114, 0.0
    %v116 = vmul.f32 %v115, %v115
    %v117 = vmul.f32 %v97, %v116
    %v118 = vadd.f32 %v113, %v117
    %v119 = vld [vmem:[#allocation2] sm:$0x1]
    %vm120 = vcmask 7168
    %v121 = vsel %vm120, %v118, 0.0
    %122 = vadd.xlane.f32.xlu0 %v121
    %v123 = vpop.xlane.xlu0 %122
    %v124 = vrot.slane %v123, 4
    %v125 = vadd.f32 %v123, %v124
    %v126 = vrot.slane %v125, 2
    %v127 = vadd.f32 %v125, %v126
    %v128 = vrot.slane %v127, 1
    %v129 = vadd.f32 %v127, %v128
    %s130 = vtos %v129
    %v131 = vstv %s130
    %v132 = vadd.f32 %v119, %v131
    %vm133 = vcmask 0
    %134 = vst.msk [vmem:[#allocation2] sm:$0x1] %vm133, %v132
    // Predicated region
    $region22: #{tpu_custom_call.1} parent=1 // pred_check
      %p135 = pneg %p89
    $region23: #{tpu_custom_call.1} parent=1 // pred_check_branch
      %137 = sbr.rel (%p135) target = $region25
    $region24: #{tpu_custom_call.1} parent=1 // pred_region
      %v138 = vld [vmem:[#allocation2] sm:$0x1]
      %v139 = vadd.f32 %v138, 0.0
      %s140 = vtos %v139
      %v141 = vstv %s140
      %142 = vst [vmem:[#allocation6] sm:$0xff] %v141
    $region25: #{tpu_custom_call.1} parent=1 // pred_fallthru
      _
    // Predicated region
    $region26: #{tpu_custom_call.1} parent=1 // pred_check
      _
    $region27: #{tpu_custom_call.1} parent=1 // pred_check_branch
      %144 = sbr.rel (0) target = $region29
    $region28: #{tpu_custom_call.1} parent=1 // pred_region
      %s146 = ssub.s32 128, 128
      %147 = vsyncadd [#allocation5], %s146
      %s149 = sshll.u32 [#allocation6], 4
      %s150 = int_to_ptr.vmem [resolvable:$true] %s149
      %152 = dma.vmem_to_hbm [thread:$0]  %s150, 128, %s3, [#allocation5]
    $region29: #{tpu_custom_call.1} parent=1 // pred_fallthru
      _
    // Predicated region
    $region30: #{tpu_custom_call.1} parent=1 // pred_check
      _
    $region31: #{tpu_custom_call.1} parent=1 // pred_check_branch
      %154 = sbr.rel (0) target = $region33
    $region32: #{tpu_custom_call.1} parent=1 // pred_region
      %155 = dma.done [#allocation5], 128
    $region33: #{tpu_custom_call.1} parent=1 // pred_fallthru
      _
    %156 = vsyncpa [#allocation4], 1
    %157 = vsyncpa [#allocation5], 1

</llo_original>
